<compile_context>
chip_gen: v7x
topology: tpu7x:2x2x1
jax: 0.10.0
libtpu: 0.0.40
codegen_flags: <defaults>
</compile_context>

<pallas_src>
import functools

import jax
import jax.numpy as jnp
import numpy as np
from jax.experimental import pallas as pl
from jax.experimental.pallas import tpu as pltpu


def _yolo_tile_kernel(p_ref, t_ref, out_ref, *, n_cells, tile_rows,
                      l_coord, l_noobj):
    """One tile of grid cells.

    p_ref / t_ref : (tile_rows, 30) — natural layout block (one contiguous
                    window of the flattened (M, 30) tensors).
    out_ref       : (8, 128) f32    — this tile's partial sum / 1024.
    """
    pid = pl.program_id(0)

    # Channel-major relayout once per tile, in VMEM (XLU; overlaps the DMA).
    p = jnp.transpose(p_ref[...].astype(jnp.float32))   # (30, T)
    t = jnp.transpose(t_ref[...].astype(jnp.float32))   # (30, T)

    # Dense (30, T) difference/square: full sublane utilization for the
    # xy / confidence / class channels.
    d = p - t
    dsq = d * d

    # Validity mask for the ragged last tile (block may extend past M cells).
    lane = jax.lax.broadcasted_iota(jnp.int32, (1, tile_rows), 1)
    valid = (pid * tile_rows + lane) < n_cells

    t_conf = t[4:5]
    coo = (t_conf > 0.0) & valid     # object cells
    noo = (t_conf == 0.0) & valid    # no-object cells

    # ---- no-object confidence loss (channels 4 and 9) ----------------------
    noo_term = dsq[4:5] + dsq[9:10]

    # ---- class loss (channels 10:30), per-cell sum over sublanes ------------
    class_pc = jnp.sum(dsq[10:30], axis=0, keepdims=True)

    # ---- IoU of both predicted boxes vs target box 0 ------------------------
    INV7 = 1.0 / 7.0                 # constant-divisor divide -> multiply
    t_ctr = t[0:2] * INV7
    t_half = 0.5 * t[2:4]
    t_lt = t_ctr - t_half            # (2,T): left/top
    t_rb = t_ctr + t_half            # (2,T): right/bottom
    t_wh = t_rb - t_lt
    t_area = t_wh[0:1] * t_wh[1:2]   # shared by both IoUs

    def inter_and_denom(pbox):       # pbox: (4,T) = [x, y, w, h]
        ctr = pbox[0:2] * INV7
        half = 0.5 * pbox[2:4]
        lt = ctr - half
        rb = ctr + half
        wh_i = jnp.maximum(jnp.minimum(rb, t_rb) - jnp.maximum(lt, t_lt), 0.0)
        inter = wh_i[0:1] * wh_i[1:2]
        wh = rb - lt
        area = wh[0:1] * wh[1:2]
        return inter, area + t_area - inter

    inter0, den0 = inter_and_denom(p[0:4])
    inter1, den1 = inter_and_denom(p[5:9])

    # Responsibility via cross-multiplication: exact f32 comparison, no divide
    # on the decision path.  Strict `>` keeps torch's first-max-on-ties
    # behaviour (box 0 wins ties).
    box1_resp = (inter1 * den0) > (inter0 * den1)

    # Only the responsible box's IoU value is needed -> one approx reciprocal
    # on the EUP (free slot), well inside the loss tolerance.
    resp_inter = jnp.where(box1_resp, inter1, inter0)
    resp_den = jnp.where(box1_resp, den1, den0)
    max_iou = resp_inter * pl.reciprocal(resp_den, approx=True)

    resp_conf = jnp.where(box1_resp, p[9:10], p[4:5])
    notresp_conf = jnp.where(box1_resp, p[4:5], p[9:10])
    contain = (resp_conf - max_iou) ** 2
    not_contain = notresp_conf * notresp_conf

    # (sqrt(pw)-sqrt(tw))^2 + (sqrt(ph)-sqrt(th))^2
    #   = pw + tw + ph + th - 2*(sqrt(pw*tw) + sqrt(ph*th))
    # -> one (2,T) sqrt instead of four (1,T) sqrts per box pair.
    def sqrt_wh_term(pwh, twh):      # (2,T),(2,T) -> (1,T)
        s = jnp.sqrt(pwh * twh)
        return (pwh[0:1] + pwh[1:2] + twh[0:1] + twh[1:2]
                - 2.0 * (s[0:1] + s[1:2]))

    loc0 = dsq[0:1] + dsq[1:2] + sqrt_wh_term(p[2:4], t[2:4])
    loc1 = dsq[5:6] + dsq[6:7] + sqrt_wh_term(p[7:9], t[7:9])
    loc = jnp.where(box1_resp, loc1, loc0)

    # ---- fused per-cell accumulator, single reduce ---------------------------
    obj_term = class_pc + l_coord * loc + 2.0 * contain + not_contain
    cell = (jnp.where(coo, obj_term, 0.0)
            + jnp.where(noo, l_noobj * noo_term, 0.0))

    # Write tile_sum/1024 broadcast to a lane-dense block so the wrapper can do
    # one plain dense jnp.sum over all partials (division by 1024 is exact).
    out_ref[...] = jnp.broadcast_to(jnp.sum(cell) * (1.0 / 1024.0), (8, 128))


def make_yolo_loss(S, B, l_coord, l_noobj, tile_rows=8192):
    """Returns loss_fn(pred, target) reproducing yoloLoss.forward()."""
    assert B == 2, "reference module hard-codes 2 boxes per cell (30 channels)"
    l_coord = float(l_coord)
    l_noobj = float(l_noobj)

    def _cdiv(a, b):
        return -(-a // b)

    def _round_up(a, b):
        return _cdiv(a, b) * b

    # Rows-per-block cap: always a multiple of 128 (so blocks satisfy the
    # (8,128) rule and post-transpose lanes are full vregs) and <= 8192 so the
    # double-buffered, lane-padded (tile,30)->(tile,128) input blocks plus
    # intermediates stay well inside v7x's 64 MiB physical VMEM.
    cap = min(_round_up(max(int(tile_rows), 128), 128), 8192)

    def loss_fn(pred, target):
        # pred/target: (N, S, S, 30) float, channel-last (as in PyTorch).
        N = pred.shape[0]
        C = pred.shape[-1]
        assert C == 30
        M = N * S * S                 # number of grid cells

        # Flatten to (M, 30) — no transpose, no pad; the ragged tail of the
        # last block is masked in-kernel.
        p_nat = pred.reshape(M, C)
        t_nat = target.reshape(M, C)

        if M <= cap:
            tr, num_tiles = _round_up(M, 128), 1
        else:
            # Even number of near-equal tiles -> both TensorCores of a v7x
            # chip get balanced work on the "parallel" axis.
            n_even = 2 * _cdiv(M, 2 * cap)
            tr = _round_up(_cdiv(M, n_even), 128)
            num_tiles = _cdiv(M, tr)

        kernel = functools.partial(
            _yolo_tile_kernel, n_cells=M, tile_rows=tr,
            l_coord=l_coord, l_noobj=l_noobj)

        # 2 inputs x 2 pipeline buffers x lane-padded block, plus headroom for
        # the transposed slabs / intermediates.  Explicit so v5e's 16 MiB
        # scoped default never binds; max value (~40 MiB) fits v7x's 64 MiB.
        in_block_bytes = tr * 128 * 4
        vmem_limit = 4 * in_block_bytes + (24 << 20)

        partials = pl.pallas_call(
            kernel,
            out_shape=jax.ShapeDtypeStruct((num_tiles * 8, 128), jnp.float32),
            grid=(num_tiles,),
            in_specs=[
                pl.BlockSpec((tr, C), lambda i: (i, 0)),
                pl.BlockSpec((tr, C), lambda i: (i, 0)),
            ],
            out_specs=pl.BlockSpec((8, 128), lambda i: (i, 0)),
            compiler_params=pltpu.CompilerParams(
                dimension_semantics=("parallel",),
                vmem_limit_bytes=vmem_limit),
        )(p_nat, t_nat)

        # Each (8,128) block holds tile_sum/1024 in every element.
        return jnp.sum(partials) / N

    return jax.jit(loss_fn)


def torch_style_reference(pred, target, l_coord, l_noobj):
    """Literal NumPy transcription of the PyTorch forward (for validation)."""
    pred = np.asarray(pred, dtype=np.float64)
    target = np.asarray(target, dtype=np.float64)
    N = pred.shape[0]
    coo = target[..., 4] > 0
    noo = target[..., 4] == 0

    coo_pred = pred[coo].reshape(-1, 30)
    box_pred = coo_pred[:, :10].reshape(-1, 5)
    class_pred = coo_pred[:, 10:]
    coo_target = target[coo].reshape(-1, 30)
    box_target = coo_target[:, :10].reshape(-1, 5)
    class_target = coo_target[:, 10:]

    noo_pred = pred[noo].reshape(-1, 30)
    noo_target = target[noo].reshape(-1, 30)
    nooobj_loss = np.sum((noo_pred[:, [4, 9]] - noo_target[:, [4, 9]]) ** 2)

    resp = np.zeros(box_target.shape[0], dtype=bool)
    notresp = np.zeros(box_target.shape[0], dtype=bool)
    box_target_iou = np.zeros_like(box_target)
    for i in range(0, box_target.shape[0], 2):
        box1 = box_pred[i:i + 2]
        b1 = np.zeros((2, 4))
        b1[:, :2] = box1[:, :2] / 7.0 - 0.5 * box1[:, 2:4]
        b1[:, 2:] = box1[:, :2] / 7.0 + 0.5 * box1[:, 2:4]
        box2 = box_target[i:i + 1]
        b2 = np.zeros((1, 4))
        b2[:, :2] = box2[:, :2] / 7.0 - 0.5 * box2[:, 2:4]
        b2[:, 2:] = box2[:, :2] / 7.0 + 0.5 * box2[:, 2:4]
        lt = np.maximum(b1[:, None, :2], b2[None, :, :2])
        rb = np.minimum(b1[:, None, 2:], b2[None, :, 2:])
        wh = np.clip(rb - lt, 0, None)
        inter = wh[..., 0] * wh[..., 1]
        a1 = ((b1[:, 2] - b1[:, 0]) * (b1[:, 3] - b1[:, 1]))[:, None]
        a2 = ((b2[:, 2] - b2[:, 0]) * (b2[:, 3] - b2[:, 1]))[None, :]
        iou = inter / (a1 + a2 - inter)
        mi = int(np.argmax(iou[:, 0]))
        resp[i + mi] = True
        notresp[i + 1 - mi] = True
        box_target_iou[i + mi, 4] = iou[mi, 0]

    bpr = box_pred[resp]
    btr_iou = box_target_iou[resp]
    btr = box_target[resp]
    contain = np.sum((bpr[:, 4] - btr_iou[:, 4]) ** 2)
    loc = (np.sum((bpr[:, :2] - btr[:, :2]) ** 2)
           + np.sum((np.sqrt(bpr[:, 2:4]) - np.sqrt(btr[:, 2:4])) ** 2))
    bpnr = box_pred[notresp]
    not_contain = np.sum(bpnr[:, 4] ** 2)
    class_loss = np.sum((class_pred - class_target) ** 2)
    return (l_coord * loc + 2 * contain + not_contain
            + l_noobj * nooobj_loss + class_loss) / N


if __name__ == "__main__":
    # yoloLoss(S=7, B=2, l_coord=5, l_noobj=0.5)
    S, B, C = 7, 2, 20
    l_coord, l_noobj = 5.0, 0.5

    def make_inputs(N, key):
        k1, k2, k3, k4, k5 = jax.random.split(key, 5)
        # predictions: sigmoid keeps w/h > 0 (torch.sqrt in the reference
        # assumes it)
        pred = jax.nn.sigmoid(
            jax.random.normal(k1, (N, S, S, B * 5 + C), dtype=jnp.float32))
        # targets: ~25% of cells contain an object; duplicated box (YOLO-v1)
        obj = (jax.random.uniform(k2, (N, S, S)) < 0.25).astype(jnp.float32)
        box_xy = jax.random.uniform(k3, (N, S, S, 2), minval=0.0, maxval=1.0)
        box_wh = jax.random.uniform(k4, (N, S, S, 2), minval=0.1, maxval=0.9)
        cls_onehot = jax.nn.one_hot(
            jax.random.randint(k5, (N, S, S), 0, C), C, dtype=jnp.float32)
        box5 = jnp.concatenate(
            [box_xy, box_wh, jnp.ones((N, S, S, 1), jnp.float32)], axis=-1)
        target = jnp.concatenate(
            [box5, box5, cls_onehot], axis=-1) * obj[..., None]
        return pred, target.astype(jnp.float32)

    key = jax.random.PRNGKey(0)
    k_a, k_b = jax.random.split(key)

    # Case 1: module-default small shapes (batch=2) -> single ragged tile.
    pred, target = make_inputs(2, k_a)
    loss_fn = make_yolo_loss(S, B, l_coord, l_noobj)
    loss = jax.block_until_ready(loss_fn(pred, target))
    ref = torch_style_reference(pred, target, l_coord, l_noobj)
    np.testing.assert_allclose(float(loss), float(ref), rtol=2e-3, atol=2e-3)

    # Case 2: tiny tile cap to exercise the multi-tile grid (even "parallel"
    # split, per-tile partial sums, ragged last block masking).
    pred2, target2 = make_inputs(4, k_b)
    loss_fn2 = make_yolo_loss(S, B, l_coord, l_noobj, tile_rows=128)
    loss2 = jax.block_until_ready(loss_fn2(pred2, target2))
    ref2 = torch_style_reference(pred2, target2, l_coord, l_noobj)
    np.testing.assert_allclose(float(loss2), float(ref2), rtol=2e-3, atol=2e-3)

    print("KERNEL_OK")
</pallas_src>

<mosaic_0001>
module attributes {stable_mosaic.version = 11 : i64} {
  func.func @_yolo_tile_kernel(%arg0: i32, %arg1: memref<128x30xf32, #tpu.memory_space<vmem>>, %arg2: memref<128x30xf32, #tpu.memory_space<vmem>>, %arg3: memref<8x128xf32, #tpu.memory_space<vmem>>) attributes {dimension_semantics = [#tpu.dimension_semantics<parallel>], iteration_bounds = array<i64: 1>, scalar_prefetch = 0 : i64, scratch_operands = 0 : i64, tpu.core_type = #tpu.core_type<tc>, window_params = [{transform_indices = @transform_0, window_bounds = array<i64: 128, 30>}, {transform_indices = @transform_1, window_bounds = array<i64: 128, 30>}, {transform_indices = @transform_2, window_bounds = array<i64: 8, 128>}]} {
    %c0 = arith.constant 0 : index
    %c0_0 = arith.constant 0 : index
    %0 = vector.load %arg1[%c0, %c0_0] : memref<128x30xf32, #tpu.memory_space<vmem>>, vector<128x30xf32>
    %1 = tpu.transpose %0, [1, 0] : vector<128x30xf32> -> vector<30x128xf32>
    %c0_1 = arith.constant 0 : index
    %c0_2 = arith.constant 0 : index
    %2 = vector.load %arg2[%c0_1, %c0_2] : memref<128x30xf32, #tpu.memory_space<vmem>>, vector<128x30xf32>
    %3 = tpu.transpose %2, [1, 0] : vector<128x30xf32> -> vector<30x128xf32>
    %4 = arith.subf %1, %3 : vector<30x128xf32>
    %5 = arith.mulf %4, %4 : vector<30x128xf32>
    %6 = tpu.iota {dimensions = array<i32: 1>} : vector<1x128xi32>
    %c128_i32 = arith.constant 128 : i32
    %7 = arith.muli %arg0, %c128_i32 : i32
    %8 = vector.broadcast %7 : i32 to vector<1x128xi32>
    %9 = arith.addi %8, %6 : vector<1x128xi32>
    %c98_i32 = arith.constant 98 : i32
    %10 = vector.broadcast %c98_i32 : i32 to vector<1x128xi32>
    %11 = arith.cmpi slt, %9, %10 : vector<1x128xi32>
    %12 = vector.extract_strided_slice %3 {offsets = [4, 0], sizes = [1, 128], strides = [1, 1]} : vector<30x128xf32> to vector<1x128xf32>
    %cst = arith.constant 0.000000e+00 : f32
    %13 = vector.broadcast %cst : f32 to vector<1x128xf32>
    %14 = arith.cmpf ogt, %12, %13 : vector<1x128xf32>
    %15 = arith.andi %14, %11 : vector<1x128xi1>
    %cst_3 = arith.constant 0.000000e+00 : f32
    %16 = vector.broadcast %cst_3 : f32 to vector<1x128xf32>
    %17 = arith.cmpf oeq, %12, %16 : vector<1x128xf32>
    %18 = arith.andi %17, %11 : vector<1x128xi1>
    %19 = vector.extract_strided_slice %5 {offsets = [4, 0], sizes = [1, 128], strides = [1, 1]} : vector<30x128xf32> to vector<1x128xf32>
    %20 = vector.extract_strided_slice %5 {offsets = [9, 0], sizes = [1, 128], strides = [1, 1]} : vector<30x128xf32> to vector<1x128xf32>
    %21 = arith.addf %19, %20 : vector<1x128xf32>
    %22 = vector.extract_strided_slice %5 {offsets = [10, 0], sizes = [20, 128], strides = [1, 1]} : vector<30x128xf32> to vector<20x128xf32>
    %cst_4 = arith.constant dense<0.000000e+00> : vector<128xf32>
    %23 = vector.multi_reduction <add>, %22, %cst_4 [0] : vector<20x128xf32> to vector<128xf32>
    %24 = vector.shape_cast %23 : vector<128xf32> to vector<1x128xf32>
    %25 = vector.extract_strided_slice %3 {offsets = [0, 0], sizes = [2, 128], strides = [1, 1]} : vector<30x128xf32> to vector<2x128xf32>
    %cst_5 = arith.constant 0.142857149 : f32
    %26 = vector.broadcast %cst_5 : f32 to vector<2x128xf32>
    %27 = arith.mulf %25, %26 : vector<2x128xf32>
    %28 = vector.extract_strided_slice %3 {offsets = [2, 0], sizes = [2, 128], strides = [1, 1]} : vector<30x128xf32> to vector<2x128xf32>
    %cst_6 = arith.constant 5.000000e-01 : f32
    %29 = vector.broadcast %cst_6 : f32 to vector<2x128xf32>
    %30 = arith.mulf %29, %28 : vector<2x128xf32>
    %31 = arith.subf %27, %30 : vector<2x128xf32>
    %32 = arith.addf %27, %30 : vector<2x128xf32>
    %33 = arith.subf %32, %31 : vector<2x128xf32>
    %34 = vector.extract_strided_slice %33 {offsets = [0, 0], sizes = [1, 128], strides = [1, 1]} : vector<2x128xf32> to vector<1x128xf32>
    %35 = vector.extract_strided_slice %33 {offsets = [1, 0], sizes = [1, 128], strides = [1, 1]} : vector<2x128xf32> to vector<1x128xf32>
    %36 = arith.mulf %34, %35 : vector<1x128xf32>
    %37 = vector.extract_strided_slice %1 {offsets = [0, 0], sizes = [4, 128], strides = [1, 1]} : vector<30x128xf32> to vector<4x128xf32>
    %38 = vector.extract_strided_slice %37 {offsets = [0, 0], sizes = [2, 128], strides = [1, 1]} : vector<4x128xf32> to vector<2x128xf32>
    %cst_7 = arith.constant 0.142857149 : f32
    %39 = vector.broadcast %cst_7 : f32 to vector<2x128xf32>
    %40 = arith.mulf %38, %39 : vector<2x128xf32>
    %41 = vector.extract_strided_slice %37 {offsets = [2, 0], sizes = [2, 128], strides = [1, 1]} : vector<4x128xf32> to vector<2x128xf32>
    %cst_8 = arith.constant 5.000000e-01 : f32
    %42 = vector.broadcast %cst_8 : f32 to vector<2x128xf32>
    %43 = arith.mulf %42, %41 : vector<2x128xf32>
    %44 = arith.subf %40, %43 : vector<2x128xf32>
    %45 = arith.addf %40, %43 : vector<2x128xf32>
    %46 = arith.minimumf %45, %32 : vector<2x128xf32>
    %47 = arith.maximumf %44, %31 : vector<2x128xf32>
    %48 = arith.subf %46, %47 : vector<2x128xf32>
    %cst_9 = arith.constant 0.000000e+00 : f32
    %49 = vector.broadcast %cst_9 : f32 to vector<2x128xf32>
    %50 = arith.maximumf %48, %49 : vector<2x128xf32>
    %51 = vector.extract_strided_slice %50 {offsets = [0, 0], sizes = [1, 128], strides = [1, 1]} : vector<2x128xf32> to vector<1x128xf32>
    %52 = vector.extract_strided_slice %50 {offsets = [1, 0], sizes = [1, 128], strides = [1, 1]} : vector<2x128xf32> to vector<1x128xf32>
    %53 = arith.mulf %51, %52 : vector<1x128xf32>
    %54 = arith.subf %45, %44 : vector<2x128xf32>
    %55 = vector.extract_strided_slice %54 {offsets = [0, 0], sizes = [1, 128], strides = [1, 1]} : vector<2x128xf32> to vector<1x128xf32>
    %56 = vector.extract_strided_slice %54 {offsets = [1, 0], sizes = [1, 128], strides = [1, 1]} : vector<2x128xf32> to vector<1x128xf32>
    %57 = arith.mulf %55, %56 : vector<1x128xf32>
    %58 = arith.addf %57, %36 : vector<1x128xf32>
    %59 = arith.subf %58, %53 : vector<1x128xf32>
    %60 = vector.extract_strided_slice %1 {offsets = [5, 0], sizes = [4, 128], strides = [1, 1]} : vector<30x128xf32> to vector<4x128xf32>
    %61 = vector.extract_strided_slice %60 {offsets = [0, 0], sizes = [2, 128], strides = [1, 1]} : vector<4x128xf32> to vector<2x128xf32>
    %cst_10 = arith.constant 0.142857149 : f32
    %62 = vector.broadcast %cst_10 : f32 to vector<2x128xf32>
    %63 = arith.mulf %61, %62 : vector<2x128xf32>
    %64 = vector.extract_strided_slice %60 {offsets = [2, 0], sizes = [2, 128], strides = [1, 1]} : vector<4x128xf32> to vector<2x128xf32>
    %cst_11 = arith.constant 5.000000e-01 : f32
    %65 = vector.broadcast %cst_11 : f32 to vector<2x128xf32>
    %66 = arith.mulf %65, %64 : vector<2x128xf32>
    %67 = arith.subf %63, %66 : vector<2x128xf32>
    %68 = arith.addf %63, %66 : vector<2x128xf32>
    %69 = arith.minimumf %68, %32 : vector<2x128xf32>
    %70 = arith.maximumf %67, %31 : vector<2x128xf32>
    %71 = arith.subf %69, %70 : vector<2x128xf32>
    %cst_12 = arith.constant 0.000000e+00 : f32
    %72 = vector.broadcast %cst_12 : f32 to vector<2x128xf32>
    %73 = arith.maximumf %71, %72 : vector<2x128xf32>
    %74 = vector.extract_strided_slice %73 {offsets = [0, 0], sizes = [1, 128], strides = [1, 1]} : vector<2x128xf32> to vector<1x128xf32>
    %75 = vector.extract_strided_slice %73 {offsets = [1, 0], sizes = [1, 128], strides = [1, 1]} : vector<2x128xf32> to vector<1x128xf32>
    %76 = arith.mulf %74, %75 : vector<1x128xf32>
    %77 = arith.subf %68, %67 : vector<2x128xf32>
    %78 = vector.extract_strided_slice %77 {offsets = [0, 0], sizes = [1, 128], strides = [1, 1]} : vector<2x128xf32> to vector<1x128xf32>
    %79 = vector.extract_strided_slice %77 {offsets = [1, 0], sizes = [1, 128], strides = [1, 1]} : vector<2x128xf32> to vector<1x128xf32>
    %80 = arith.mulf %78, %79 : vector<1x128xf32>
    %81 = arith.addf %80, %36 : vector<1x128xf32>
    %82 = arith.subf %81, %76 : vector<1x128xf32>
    %83 = arith.mulf %76, %59 : vector<1x128xf32>
    %84 = arith.mulf %53, %82 : vector<1x128xf32>
    %85 = arith.cmpf ogt, %83, %84 : vector<1x128xf32>
    %86 = arith.select %85, %76, %53 : vector<1x128xi1>, vector<1x128xf32>
    %87 = arith.select %85, %82, %59 : vector<1x128xi1>, vector<1x128xf32>
    %88 = tpu.reciprocal %87 {approx = true} : vector<1x128xf32> -> vector<1x128xf32>
    %89 = arith.mulf %86, %88 : vector<1x128xf32>
    %90 = vector.extract_strided_slice %1 {offsets = [9, 0], sizes = [1, 128], strides = [1, 1]} : vector<30x128xf32> to vector<1x128xf32>
    %91 = vector.extract_strided_slice %1 {offsets = [4, 0], sizes = [1, 128], strides = [1, 1]} : vector<30x128xf32> to vector<1x128xf32>
    %92 = arith.select %85, %90, %91 : vector<1x128xi1>, vector<1x128xf32>
    %93 = vector.extract_strided_slice %1 {offsets = [4, 0], sizes = [1, 128], strides = [1, 1]} : vector<30x128xf32> to vector<1x128xf32>
    %94 = vector.extract_strided_slice %1 {offsets = [9, 0], sizes = [1, 128], strides = [1, 1]} : vector<30x128xf32> to vector<1x128xf32>
    %95 = arith.select %85, %93, %94 : vector<1x128xi1>, vector<1x128xf32>
    %96 = arith.subf %92, %89 : vector<1x128xf32>
    %97 = arith.mulf %96, %96 : vector<1x128xf32>
    %98 = arith.mulf %95, %95 : vector<1x128xf32>
    %99 = vector.extract_strided_slice %5 {offsets = [0, 0], sizes = [1, 128], strides = [1, 1]} : vector<30x128xf32> to vector<1x128xf32>
    %100 = vector.extract_strided_slice %5 {offsets = [1, 0], sizes = [1, 128], strides = [1, 1]} : vector<30x128xf32> to vector<1x128xf32>
    %101 = arith.addf %99, %100 : vector<1x128xf32>
    %102 = vector.extract_strided_slice %1 {offsets = [2, 0], sizes = [2, 128], strides = [1, 1]} : vector<30x128xf32> to vector<2x128xf32>
    %103 = vector.extract_strided_slice %3 {offsets = [2, 0], sizes = [2, 128], strides = [1, 1]} : vector<30x128xf32> to vector<2x128xf32>
    %104 = arith.mulf %102, %103 : vector<2x128xf32>
    %105 = math.sqrt %104 : vector<2x128xf32>
    %106 = vector.extract_strided_slice %102 {offsets = [0, 0], sizes = [1, 128], strides = [1, 1]} : vector<2x128xf32> to vector<1x128xf32>
    %107 = vector.extract_strided_slice %102 {offsets = [1, 0], sizes = [1, 128], strides = [1, 1]} : vector<2x128xf32> to vector<1x128xf32>
    %108 = arith.addf %106, %107 : vector<1x128xf32>
    %109 = vector.extract_strided_slice %103 {offsets = [0, 0], sizes = [1, 128], strides = [1, 1]} : vector<2x128xf32> to vector<1x128xf32>
    %110 = arith.addf %108, %109 : vector<1x128xf32>
    %111 = vector.extract_strided_slice %103 {offsets = [1, 0], sizes = [1, 128], strides = [1, 1]} : vector<2x128xf32> to vector<1x128xf32>
    %112 = arith.addf %110, %111 : vector<1x128xf32>
    %113 = vector.extract_strided_slice %105 {offsets = [0, 0], sizes = [1, 128], strides = [1, 1]} : vector<2x128xf32> to vector<1x128xf32>
    %114 = vector.extract_strided_slice %105 {offsets = [1, 0], sizes = [1, 128], strides = [1, 1]} : vector<2x128xf32> to vector<1x128xf32>
    %115 = arith.addf %113, %114 : vector<1x128xf32>
    %cst_13 = arith.constant 2.000000e+00 : f32
    %116 = vector.broadcast %cst_13 : f32 to vector<1x128xf32>
    %117 = arith.mulf %116, %115 : vector<1x128xf32>
    %118 = arith.subf %112, %117 : vector<1x128xf32>
    %119 = arith.addf %101, %118 : vector<1x128xf32>
    %120 = vector.extract_strided_slice %5 {offsets = [5, 0], sizes = [1, 128], strides = [1, 1]} : vector<30x128xf32> to vector<1x128xf32>
    %121 = vector.extract_strided_slice %5 {offsets = [6, 0], sizes = [1, 128], strides = [1, 1]} : vector<30x128xf32> to vector<1x128xf32>
    %122 = arith.addf %120, %121 : vector<1x128xf32>
    %123 = vector.extract_strided_slice %1 {offsets = [7, 0], sizes = [2, 128], strides = [1, 1]} : vector<30x128xf32> to vector<2x128xf32>
    %124 = vector.extract_strided_slice %3 {offsets = [7, 0], sizes = [2, 128], strides = [1, 1]} : vector<30x128xf32> to vector<2x128xf32>
    %125 = arith.mulf %123, %124 : vector<2x128xf32>
    %126 = math.sqrt %125 : vector<2x128xf32>
    %127 = vector.extract_strided_slice %123 {offsets = [0, 0], sizes = [1, 128], strides = [1, 1]} : vector<2x128xf32> to vector<1x128xf32>
    %128 = vector.extract_strided_slice %123 {offsets = [1, 0], sizes = [1, 128], strides = [1, 1]} : vector<2x128xf32> to vector<1x128xf32>
    %129 = arith.addf %127, %128 : vector<1x128xf32>
    %130 = vector.extract_strided_slice %124 {offsets = [0, 0], sizes = [1, 128], strides = [1, 1]} : vector<2x128xf32> to vector<1x128xf32>
    %131 = arith.addf %129, %130 : vector<1x128xf32>
    %132 = vector.extract_strided_slice %124 {offsets = [1, 0], sizes = [1, 128], strides = [1, 1]} : vector<2x128xf32> to vector<1x128xf32>
    %133 = arith.addf %131, %132 : vector<1x128xf32>
    %134 = vector.extract_strided_slice %126 {offsets = [0, 0], sizes = [1, 128], strides = [1, 1]} : vector<2x128xf32> to vector<1x128xf32>
    %135 = vector.extract_strided_slice %126 {offsets = [1, 0], sizes = [1, 128], strides = [1, 1]} : vector<2x128xf32> to vector<1x128xf32>
    %136 = arith.addf %134, %135 : vector<1x128xf32>
    %cst_14 = arith.constant 2.000000e+00 : f32
    %137 = vector.broadcast %cst_14 : f32 to vector<1x128xf32>
    %138 = arith.mulf %137, %136 : vector<1x128xf32>
    %139 = arith.subf %133, %138 : vector<1x128xf32>
    %140 = arith.addf %122, %139 : vector<1x128xf32>
    %141 = arith.select %85, %140, %119 : vector<1x128xi1>, vector<1x128xf32>
    %cst_15 = arith.constant 5.000000e+00 : f32
    %142 = vector.broadcast %cst_15 : f32 to vector<1x128xf32>
    %143 = arith.mulf %142, %141 : vector<1x128xf32>
    %144 = arith.addf %24, %143 : vector<1x128xf32>
    %cst_16 = arith.constant 2.000000e+00 : f32
    %145 = vector.broadcast %cst_16 : f32 to vector<1x128xf32>
    %146 = arith.mulf %145, %97 : vector<1x128xf32>
    %147 = arith.addf %144, %146 : vector<1x128xf32>
    %148 = arith.addf %147, %98 : vector<1x128xf32>
    %cst_17 = arith.constant 0.000000e+00 : f32
    %149 = vector.broadcast %cst_17 : f32 to vector<1x128xf32>
    %150 = arith.select %15, %148, %149 : vector<1x128xi1>, vector<1x128xf32>
    %cst_18 = arith.constant 5.000000e-01 : f32
    %151 = vector.broadcast %cst_18 : f32 to vector<1x128xf32>
    %152 = arith.mulf %151, %21 : vector<1x128xf32>
    %cst_19 = arith.constant 0.000000e+00 : f32
    %153 = vector.broadcast %cst_19 : f32 to vector<1x128xf32>
    %154 = arith.select %18, %152, %153 : vector<1x128xi1>, vector<1x128xf32>
    %155 = arith.addf %150, %154 : vector<1x128xf32>
    %156 = vector.shape_cast %155 : vector<1x128xf32> to vector<1x1x128xf32>
    %cst_20 = arith.constant dense<0.000000e+00> : vector<1xf32>
    %157 = vector.multi_reduction <add>, %156, %cst_20 [1, 2] : vector<1x1x128xf32> to vector<1xf32>
    %158 = vector.shape_cast %157 : vector<1xf32> to vector<1x1x1xf32>
    %159 = vector.extract %158[0, 0, 0] : f32 from vector<1x1x1xf32>
    %cst_21 = arith.constant 9.765625E-4 : f32
    %160 = arith.mulf %159, %cst_21 : f32
    %161 = vector.broadcast %160 : f32 to vector<8x128xf32>
    %c0_22 = arith.constant 0 : index
    %c0_23 = arith.constant 0 : index
    %162 = vector.load %arg3[%c0_22, %c0_23] : memref<8x128xf32, #tpu.memory_space<vmem>>, vector<8x128xf32>
    tpu.vector_store %arg3[%c0_22, %c0_23], %161 {strides = array<i32>} : memref<8x128xf32, #tpu.memory_space<vmem>>, vector<8x128xf32>,
    return
  }
  func.func @transform_0(%arg0: i32) -> (i32, i32) {
    %c0_i32 = arith.constant 0 : i32
    %c0_i32_0 = arith.constant 0 : i32
    return %arg0, %c0_i32 : i32, i32
  }
  func.func @transform_1(%arg0: i32) -> (i32, i32) {
    %c0_i32 = arith.constant 0 : i32
    %c0_i32_0 = arith.constant 0 : i32
    return %arg0, %c0_i32 : i32, i32
  }
  func.func @transform_2(%arg0: i32) -> (i32, i32) {
    %c0_i32 = arith.constant 0 : i32
    %c0_i32_0 = arith.constant 0 : i32
    return %arg0, %c0_i32 : i32, i32
  }
}

</mosaic_0001>

<llo_original>
// kernel: loss_fn.1
$region0: #{loss_fn.1}
  #allocation0 [shape = 'u32[]', space=smem, size = 0x4, offset = 0x4, fixed_abs, tag = 'smem constant byte address 0x4 - core index']
  #allocation1 [shape = 'u32[144,128]{1,0:T(1,128)}', space=vmem, size = 0x12000, scoped, tag = 'internal scratch']
  %s0 = inlined_call_operand.vmem [shape: f32[98,30], index: 0, kind: input, shape index: {}]
  %s1 = inlined_call_operand.vmem [shape: f32[98,30], index: 1, kind: input, shape index: {}]
  %s2 = inlined_call_operand.vmem [shape: f32[8,128], index: 2, kind: output, shape index: {}]
  %s3 = sld [smem:[#allocation0]]
  $region18: #{loss_fn.1} parent=0
    _
  %s5 = ssub.s32 1, %s3
  %s6 = scalar_select 0, %s5, %s3
  // Predicated region
  $region2: #{loss_fn.1} parent=0 // pred_check
    _
  $region3: #{loss_fn.1} parent=0 // pred_check_branch
    %8 = sbr.rel (0) target = $region5
  $region4: #{loss_fn.1} parent=0 // pred_region
    _
  $region5: #{loss_fn.1} parent=0 // pred_fallthru
    _
  // Predicated region
  $region6: #{loss_fn.1} parent=0 // pred_check
    _
  $region7: #{loss_fn.1} parent=0 // pred_check_branch
    %10 = sbr.rel (0) target = $region9
  $region8: #{loss_fn.1} parent=0 // pred_region
    _
  $region9: #{loss_fn.1} parent=0 // pred_fallthru
    _
  %v11 = vld [vmem:[%s0] sm:$0xff]
  %v12 = vld [vmem:[%s0 + $0x8] sm:$0xff]
  %v13 = vld [vmem:[%s0 + $0x10] sm:$0xff]
  %v14 = vld [vmem:[%s0 + $0x18] sm:$0xff]
  %v15 = vld [vmem:[%s0 + $0x20] sm:$0xff]
  %v16 = vld [vmem:[%s0 + $0x28] sm:$0xff]
  %v17 = vld [vmem:[%s0 + $0x30] sm:$0xff]
  %v18 = vld [vmem:[%s0 + $0x38] sm:$0xff]
  %v19 = vld [vmem:[%s0 + $0x40] sm:$0xff]
  %v20 = vld [vmem:[%s0 + $0x48] sm:$0xff]
  %v21 = vld [vmem:[%s0 + $0x50] sm:$0xff]
  %v22 = vld [vmem:[%s0 + $0x58] sm:$0xff]
  %v23 = vld [vmem:[%s0 + $0x60] sm:$0xff]
  %v24 = vld [vmem:[%s0 + $0x68] sm:$0xff]
  %v25 = vld [vmem:[%s0 + $0x70] sm:$0xff]
  %v26 = vld [vmem:[%s0 + $0x78] sm:$0xff]
  %27 = vxpose.xlu0.b32.start [1/16] %v11, 128
  %28 = vxpose.xlu0.b32.cont [2/16] %v12, 128
  %29 = vxpose.xlu0.b32.cont [3/16] %v13, 128
  %30 = vxpose.xlu0.b32.cont [4/16] %v14, 128
  %31 = vxpose.xlu0.b32.cont [5/16] %v15, 128
  %32 = vxpose.xlu0.b32.cont [6/16] %v16, 128
  %33 = vxpose.xlu0.b32.cont [7/16] %v17, 128
  %34 = vxpose.xlu0.b32.cont [8/16] %v18, 128
  %35 = vxpose.xlu0.b32.cont [9/16] %v19, 128
  %36 = vxpose.xlu0.b32.cont [10/16] %v20, 128
  %37 = vxpose.xlu0.b32.cont [11/16] %v21, 128
  %38 = vxpose.xlu0.b32.cont [12/16] %v22, 128
  %39 = vxpose.xlu0.b32.cont [13/16] %v23, 128
  %40 = vxpose.xlu0.b32.cont [14/16] %v24, 128
  %41 = vxpose.xlu0.b32.cont [15/16] %v25, 128
  %42 = vxpose.xlu0.b32.end [16/16] %v26, 128
  %v43 = vpop.trf.xlu0
  %v44 = vpop.trf.xlu0
  %v45 = vpop.trf.xlu0
  %v46 = vpop.trf.xlu0
  %v47 = vpop.trf.xlu0
  %v48 = vpop.trf.xlu0
  %v49 = vpop.trf.xlu0
  %v50 = vpop.trf.xlu0
  %v51 = vpop.trf.xlu0
  %v52 = vpop.trf.xlu0
  %v53 = vpop.trf.xlu0
  %v54 = vpop.trf.xlu0
  %v55 = vpop.trf.xlu0
  %v56 = vpop.trf.xlu0
  %v57 = vpop.trf.xlu0
  %v58 = vpop.trf.xlu0
  %v59 = vld [vmem:[%s1] sm:$0xff]
  %v60 = vld [vmem:[%s1 + $0x8] sm:$0xff]
  %v61 = vld [vmem:[%s1 + $0x10] sm:$0xff]
  %v62 = vld [vmem:[%s1 + $0x18] sm:$0xff]
  %v63 = vld [vmem:[%s1 + $0x20] sm:$0xff]
  %v64 = vld [vmem:[%s1 + $0x28] sm:$0xff]
  %v65 = vld [vmem:[%s1 + $0x30] sm:$0xff]
  %v66 = vld [vmem:[%s1 + $0x38] sm:$0xff]
  %v67 = vld [vmem:[%s1 + $0x40] sm:$0xff]
  %v68 = vld [vmem:[%s1 + $0x48] sm:$0xff]
  %v69 = vld [vmem:[%s1 + $0x50] sm:$0xff]
  %v70 = vld [vmem:[%s1 + $0x58] sm:$0xff]
  %v71 = vld [vmem:[%s1 + $0x60] sm:$0xff]
  %v72 = vld [vmem:[%s1 + $0x68] sm:$0xff]
  %v73 = vld [vmem:[%s1 + $0x70] sm:$0xff]
  %v74 = vld [vmem:[%s1 + $0x78] sm:$0xff]
  %75 = vxpose.xlu0.b32.start [1/16] %v59, 128
  %76 = vxpose.xlu0.b32.cont [2/16] %v60, 128
  %77 = vxpose.xlu0.b32.cont [3/16] %v61, 128
  %78 = vxpose.xlu0.b32.cont [4/16] %v62, 128
  %79 = vxpose.xlu0.b32.cont [5/16] %v63, 128
  %80 = vxpose.xlu0.b32.cont [6/16] %v64, 128
  %81 = vxpose.xlu0.b32.cont [7/16] %v65, 128
  %82 = vxpose.xlu0.b32.cont [8/16] %v66, 128
  %83 = vxpose.xlu0.b32.cont [9/16] %v67, 128
  %84 = vxpose.xlu0.b32.cont [10/16] %v68, 128
  %85 = vxpose.xlu0.b32.cont [11/16] %v69, 128
  %86 = vxpose.xlu0.b32.cont [12/16] %v70, 128
  %87 = vxpose.xlu0.b32.cont [13/16] %v71, 128
  %88 = vxpose.xlu0.b32.cont [14/16] %v72, 128
  %89 = vxpose.xlu0.b32.cont [15/16] %v73, 128
  %90 = vxpose.xlu0.b32.end [16/16] %v74, 128
  %v91 = vpop.trf.xlu0
  %v92 = vpop.trf.xlu0
  %v93 = vpop.trf.xlu0
  %v94 = vpop.trf.xlu0
  %v95 = vpop.trf.xlu0
  %v96 = vpop.trf.xlu0
  %v97 = vpop.trf.xlu0
  %v98 = vpop.trf.xlu0
  %v99 = vpop.trf.xlu0
  %v100 = vpop.trf.xlu0
  %v101 = vpop.trf.xlu0
  %v102 = vpop.trf.xlu0
  %v103 = vpop.trf.xlu0
  %v104 = vpop.trf.xlu0
  %v105 = vpop.trf.xlu0
  %v106 = vpop.trf.xlu0
  %v107 = vsub.f32 %v43, %v91
  %v108 = vsub.f32 %v44, %v92
  %v109 = vsub.f32 %v45, %v93
  %v110 = vsub.f32 %v46, %v94
  %v111 = vmul.f32 %v107, %v107
  %v112 = vmul.f32 %v108, %v108
  %v113 = vmul.f32 %v109, %v109
  %v114 = vmul.f32 %v110, %v110
  %v115 = vlaneseq
  %v116 = vand.u32 %v115, 127
  %s117 = smul.u32 0, 128
  %v118 = vstv %s117
  %v119 = vadd.s32 %v118, %v116
  %vm120 = vcmp.lt.s32.totalorder %v119, 98
  %vm121 = vcmp.gt.f32.partialorder %v91, 0.0
  %vm122 = vmand %vm121, %vm120
  %vm123 = vcmp.eq.f32.partialorder %v91, 0.0
  %vm124 = vmand %vm123, %vm120
  %v126 = vrot.slane %v112, 5
  %v128 = vadd.f32 %v111, %v126
  %vm131 = vcmask 1045504
  %v132 = vrot.slane %v112, 2
  %v133 = vrot.slane %v113, 2
  %v134 = vsel %vm131, %v132, %v133
  %v135 = vrot.slane %v114, 2
  %v136 = vsel %vm131, %v133, %v135
  %v140 = vadd.f32 %v134, %v136
  %vm141 = vcmask 1043456
  %v142 = vsel %vm141, %v135, 0.0
  %v143 = vadd.f32 %v140, %v142
  %v144 = vrot.slane %v143, 4
  %v145 = vadd.f32 %v143, %v144
  %v146 = vrot.slane %v145, 2
  %v147 = vadd.f32 %v145, %v146
  %v148 = vrot.slane %v147, 1
  %v149 = vadd.f32 %v147, %v148
  %v150 = vmul.f32 %v91, 0.14285715
  %v151 = vmul.f32 %v91, 0.5
  %v153 = vrot.slane %v151, 2
  %v155 = vsub.f32 %v150, %v153
  %v156 = vadd.f32 %v150, %v153
  %v157 = vsub.f32 %v156, %v155
  %v159 = vrot.slane %v157, 1
  %v161 = vmul.f32 %v157, %v159
  %v162 = vmul.f32 %v43, 0.14285715
  %v163 = vmul.f32 %v43, 0.5
  %v165 = vrot.slane %v163, 2
  %v167 = vsub.f32 %v162, %v165
  %v168 = vadd.f32 %v162, %v165
  %v169 = vmin.f32 %v168, %v156
  %v170 = vmax.f32 %v167, %v155
  %v171 = vsub.f32 %v169, %v170
  %v172 = vmax.f32 %v171, 0.0
  %v174 = vrot.slane %v172, 1
  %v176 = vmul.f32 %v172, %v174
  %v177 = vsub.f32 %v168, %v167
  %v179 = vrot.slane %v177, 1
  %v181 = vmul.f32 %v177, %v179
  %v182 = vadd.f32 %v181, %v161
  %v183 = vsub.f32 %v182, %v176
  %v184 = vmul.f32 %v44, 0.5
  %v186 = vrot.slane %v184, 2
  %v187 = vsel %vm131, %v165, %v186
  %v189 = vsub.f32 %v162, %v187
  %v190 = vadd.f32 %v162, %v187
  %v192 = vrot.slane %v156, 3
  %v194 = vmin.f32 %v190, %v192
  %v196 = vrot.slane %v155, 3
  %v198 = vmax.f32 %v189, %v196
  %v199 = vsub.f32 %v194, %v198
  %v200 = vmax.f32 %v199, 0.0
  %v202 = vrot.slane %v200, 1
  %v204 = vmul.f32 %v200, %v202
  %v205 = vsub.f32 %v190, %v189
  %v207 = vrot.slane %v205, 1
  %v209 = vmul.f32 %v205, %v207
  %v211 = vrot.slane %v161, 3
  %v213 = vadd.f32 %v209, %v211
  %v214 = vsub.f32 %v213, %v204
  %v216 = vrot.slane %v183, 3
  %v218 = vmul.f32 %v204, %v216
  %v220 = vrot.slane %v214, 5
  %v222 = vmul.f32 %v176, %v220
  %v224 = vrot.slane %v222, 3
  %vm226 = vcmp.gt.f32.partialorder %v218, %v224
  %v228 = vrot.slane %v176, 3
  %v230 = vsel %vm226, %v204, %v228
  %v231 = vsel %vm226, %v214, %v216
  %v232 = vrcp.pop %v231
  %v233 = vmul.f32 %v230, %v232
  %v235 = vrot.slane %v44, 4
  %v238 = vrot.slane %v43, 7
  %v240 = vsel %vm226, %v235, %v238
  %v241 = vsel %vm226, %v238, %v235
  %v242 = vsub.f32 %v240, %v233
  %v243 = vmul.f32 %v242, %v242
  %v244 = vmul.f32 %v241, %v241
  %v246 = vrot.slane %v111, 1
  %v248 = vadd.f32 %v111, %v246
  %v249 = vmul.f32 %v43, %v91
  %v250 = vrsqrt.pop %v249
  %v251 = vmul.f32 %v249, %v250
  %vm252 = vcmp.eq.f32.partialorder %v249, inf
  %v253 = vsel %vm252, %v249, %v251
  %vm254 = vcmp.eq.f32.partialorder %v249, 0.0
  %v255 = vand.u32 %v249, 2147483648
  %v256 = vsel %vm254, %v255, %v253
  %v257 = vrot.slane %v43, 1
  %v259 = vadd.f32 %v43, %v257
  %v260 = vadd.f32 %v259, %v91
  %v262 = vrot.slane %v91, 1
  %v264 = vadd.f32 %v260, %v262
  %v266 = vrot.slane %v256, 1
  %v268 = vadd.f32 %v256, %v266
  %v269 = vmul.f32 %v268, 2.0
  %v270 = vsub.f32 %v264, %v269
  %v272 = vrot.slane %v270, 2
  %v274 = vadd.f32 %v248, %v272
  %v275 = vmul.f32 %v44, %v92
  %v276 = vrsqrt.pop %v275
  %v277 = vmul.f32 %v275, %v276
  %vm278 = vcmp.eq.f32.partialorder %v275, inf
  %v279 = vsel %vm278, %v275, %v277
  %vm280 = vcmp.eq.f32.partialorder %v275, 0.0
  %v281 = vand.u32 %v275, 2147483648
  %v282 = vsel %vm280, %v281, %v279
  %v283 = vrot.slane %v44, 1
  %v285 = vadd.f32 %v43, %v283
  %v286 = vadd.f32 %v285, %v91
  %v288 = vrot.slane %v92, 1
  %v290 = vadd.f32 %v286, %v288
  %v292 = vrot.slane %v282, 1
  %v294 = vadd.f32 %v256, %v292
  %v295 = vmul.f32 %v294, 2.0
  %v296 = vsub.f32 %v290, %v295
  %v298 = vrot.slane %v296, 2
  %v300 = vadd.f32 %v248, %v298
  %v302 = vrot.slane %v274, 3
  %v304 = vsel %vm226, %v300, %v302
  %v305 = vmul.f32 %v304, 5.0
  %v306 = vadd.f32 %v149, %v305
  %v307 = vmul.f32 %v243, 2.0
  %v308 = vadd.f32 %v306, %v307
  %v309 = vadd.f32 %v308, %v244
  %v311 = vrot.slane %v309, 1
  %v313 = vsel %vm122, %v311, 0.0
  %v314 = vmul.f32 %v128, 0.5
  %v315 = vsel %vm124, %v314, 0.0
  %v316 = vadd.f32 %v313, %v315
  %v318 = vrot.slane %v316, 4
  %vm320 = vcmask 1040384
  %v321 = vsel %vm320, %v318, 0.0
  %322 = vadd.xlane.f32.xlu0 %v321
  %v323 = vpop.xlane.xlu0 %322
  %v324 = vrot.slane %v323, 4
  %v325 = vadd.f32 %v323, %v324
  %v326 = vrot.slane %v325, 2
  %v327 = vadd.f32 %v325, %v326
  %v328 = vrot.slane %v327, 1
  %v329 = vadd.f32 %v327, %v328
  %s330 = vtos %v329
  %s331 = smul.f32 %s330, 0.0009765625
  %v332 = vstv %s331
  %333 = vst [vmem:[%s2] sm:$0xff] %v332
  // Predicated region
  $region10: #{loss_fn.1} parent=0 // pred_check
    _
  $region11: #{loss_fn.1} parent=0 // pred_check_branch
    %335 = sbr.rel (0) target = $region13
  $region12: #{loss_fn.1} parent=0 // pred_region
    _
  $region13: #{loss_fn.1} parent=0 // pred_fallthru
    _
  // Predicated region
  $region14: #{loss_fn.1} parent=0 // pred_check
    _
  $region15: #{loss_fn.1} parent=0 // pred_check_branch
    %337 = sbr.rel (0) target = $region17
  $region16: #{loss_fn.1} parent=0 // pred_region
    _
  $region17: #{loss_fn.1} parent=0 // pred_fallthru
    _

</llo_original>
